<compile_context>
chip_gen: v7x
topology: tpu7x:2x2x1
jax: 0.10.0
libtpu: 0.0.40
codegen_flags: <defaults>
</compile_context>

<pallas_src>
import jax
import jax.numpy as jnp
from jax.experimental import pallas as pl
from jax.experimental.pallas import tpu as pltpu

_LANE = 128
_SUB = 8                              # f32 sublanes per vreg (accumulator shape)
_MAX_BLOCK_BYTES = 2 * 1024 * 1024    # per-input block size cap (2 MiB)


def _cdiv(a, b):
    return -(-a // b)


def _round_up(a, b):
    return _cdiv(a, b) * b


def _num_tensorcores_per_chip():
    """2 on v7x (two TensorCores / chip); 1 on v5e / v6e and as safe default."""
    try:
        kind = jax.devices()[0].device_kind.lower()
    except Exception:
        return 1
    return 2 if "v7" in kind else 1


def _make_iou_kernel(*, nblk, nblk_total, block_rows, total, needs_mask):
    last_blk = nblk_total - 1

    def kernel(out_ref, tgt_ref, part_ref, acc_sum_ref, acc_prod_ref):
        c = pl.program_id(0)               # shard (TensorCore) index
        j = pl.program_id(1)               # streaming block index within shard
        blk = c * nblk + j                 # logical block index

        @pl.when(j == 0)
        def _():
            acc_sum_ref[...] = jnp.zeros_like(acc_sum_ref)
            acc_prod_ref[...] = jnp.zeros_like(acc_prod_ref)

        def accumulate(mask):
            x = out_ref[...].astype(jnp.float32)
            t = tgt_ref[...].astype(jnp.float32)
            # sigmoid(x) = 0.5 * tanh(0.5 * x) + 0.5  -> single EUP op / vreg.
            sig = 0.5 * jnp.tanh(0.5 * x) + 0.5
            s = sig + t
            p = sig * t
            if mask is not None:
                s = jnp.where(mask, s, 0.0)
                p = jnp.where(mask, p, 0.0)
            # Fold the tile into one vreg-sized accumulator: layout-preserving
            # reshape (rows grouped by sublane) + pure VALU vreg-add tree.
            acc_sum_ref[...] += jnp.sum(s.reshape(-1, _SUB, _LANE), axis=0)
            acc_prod_ref[...] += jnp.sum(p.reshape(-1, _SUB, _LANE), axis=0)

        if needs_mask:
            is_tail = blk >= last_blk       # last valid block, or a clamped
                                            # duplicate step on the 2nd shard
            @pl.when(blk < last_blk)
            def _():
                accumulate(None)            # fast path: no mask ops

            @pl.when(is_tail)
            def _():
                row = jax.lax.broadcasted_iota(jnp.int32, (block_rows, _LANE), 0)
                lane = jax.lax.broadcasted_iota(jnp.int32, (block_rows, _LANE), 1)
                elem = (blk * block_rows + row) * _LANE + lane
                accumulate(elem < total)
        else:
            accumulate(None)

        @pl.when(j == pl.num_programs(1) - 1)
        def _():
            part_ref[0, 0] = jnp.sum(acc_sum_ref[...])   # sum(sig) + sum(tgt)
            part_ref[0, 1] = jnp.sum(acc_prod_ref[...])  # sum(sig * tgt)

    return kernel


def iou_loss(output, target, eps=1e-6):
    assert output.shape == target.shape, "channel is not equal"
    total = int(output.size)

    out_flat = output.reshape(-1)
    tgt_flat = target.reshape(-1)

    itemsize_o = jnp.dtype(output.dtype).itemsize
    itemsize_t = jnp.dtype(target.dtype).itemsize

    # ---- lane alignment (rare: only when numel % 128 != 0) ----------------
    rows = _cdiv(total, _LANE)
    if rows * _LANE != total:
        # Needed only for the lane-dense 2-D reshape; padded values are
        # excluded by the in-kernel element mask, so zeros are fine.
        pad = rows * _LANE - total
        out_flat = jnp.pad(out_flat, (0, pad))
        tgt_flat = jnp.pad(tgt_flat, (0, pad))

    out2 = out_flat.reshape(rows, _LANE)
    tgt2 = tgt_flat.reshape(rows, _LANE)

    # ---- tiling ------------------------------------------------------------
    nsplit = _num_tensorcores_per_chip()                  # 2 only on v7x
    sub = max(_SUB, 32 // min(itemsize_o, itemsize_t))    # dtype-aware rows/vreg
    max_rows = _MAX_BLOCK_BYTES // (_LANE * max(itemsize_o, itemsize_t))
    block_rows = max(sub, min(max_rows, _round_up(_cdiv(rows, nsplit), sub)))
    nblk_total = _cdiv(rows, block_rows)                  # blocks covering `rows`
    nblk = _cdiv(nblk_total, nsplit)                      # inner grid extent/shard
    needs_mask = (nsplit * nblk * block_rows * _LANE) != total
    last_blk = nblk_total - 1

    def in_index_map(c, j):
        # Clamp so a (rare) duplicate step on the second shard re-reads the
        # last valid block instead of running off the array; its contribution
        # is zeroed by the element mask.
        return (jnp.minimum(c * nblk + j, last_blk), 0)

    in_spec = pl.BlockSpec((block_rows, _LANE), in_index_map)

    kernel = _make_iou_kernel(
        nblk=nblk, nblk_total=nblk_total, block_rows=block_rows,
        total=total, needs_mask=needs_mask)

    parts = pl.pallas_call(
        kernel,
        out_shape=jax.ShapeDtypeStruct((nsplit, 2), jnp.float32),
        grid_spec=pltpu.PrefetchScalarGridSpec(
            num_scalar_prefetch=0,
            grid=(nsplit, nblk),
            in_specs=[in_spec, in_spec],
            out_specs=pl.BlockSpec(
                (1, 2), lambda c, j: (c, 0), memory_space=pltpu.SMEM
            ),
            scratch_shapes=[
                pltpu.VMEM((_SUB, _LANE), jnp.float32),   # acc: sig + tgt
                pltpu.VMEM((_SUB, _LANE), jnp.float32),   # acc: sig * tgt
            ],
        ),
        compiler_params=pltpu.CompilerParams(
            dimension_semantics=("parallel", "arbitrary"),
            vmem_limit_bytes=32 * 1024 * 1024,
        ),
        cost_estimate=pl.CostEstimate(
            flops=7 * total,
            transcendentals=total,
            bytes_accessed=total * (itemsize_o + itemsize_t) + nsplit * 2 * 4,
        ),
    )(out2, tgt2)

    # Combine per-shard partials (a handful of scalar ops).
    sum_all = jnp.sum(parts[:, 0])        # sum(sigmoid(x)) + sum(target)
    intersection = jnp.sum(parts[:, 1])   # sum(sigmoid(x) * target)
    union = sum_all - intersection + eps
    return 1.0 - intersection / union


def _iou_loss_ref(output, target, eps=1e-6):
    o = jax.nn.sigmoid(output.astype(jnp.float32))
    t = target.astype(jnp.float32)
    intersection = jnp.sum(o * t)
    union = jnp.sum(o) + jnp.sum(t) - intersection + eps
    return 1.0 - intersection / union


if __name__ == "__main__":
    key = jax.random.PRNGKey(0)
    k1, k2 = jax.random.split(key)

    # small shapes consistent with a segmentation head output (NCHW)
    shape = (2, 4, 16, 16)
    logits = jax.random.normal(k1, shape, dtype=jnp.float32)
    target = (jax.random.uniform(k2, shape) > 0.5).astype(jnp.float32)

    loss = jax.block_until_ready(iou_loss(logits, target))
    ref = _iou_loss_ref(logits, target)
    assert jnp.allclose(loss, ref, atol=1e-5, rtol=1e-5), (loss, ref)

    # ragged-tail path: numel not a multiple of a full block, exercises the
    # in-kernel element mask on the last block.
    shape2 = (2, 3, 9, 7)
    logits2 = jax.random.normal(k1, shape2, dtype=jnp.float32)
    target2 = (jax.random.uniform(k2, shape2) > 0.5).astype(jnp.float32)
    loss2 = jax.block_until_ready(iou_loss(logits2, target2))
    ref2 = _iou_loss_ref(logits2, target2)
    assert jnp.allclose(loss2, ref2, atol=1e-5, rtol=1e-5), (loss2, ref2)

    print("KERNEL_OK")
</pallas_src>

<mosaic_0001>
module attributes {stable_mosaic.version = 11 : i64} {
  func.func @kernel(%arg0: i32, %arg1: i32, %arg2: memref<16x128xf32, #tpu.memory_space<vmem>>, %arg3: memref<16x128xf32, #tpu.memory_space<vmem>>, %arg4: memref<1x2xf32, #tpu.memory_space<smem>>, %arg5: memref<8x128xf32, #tpu.memory_space<vmem>>, %arg6: memref<8x128xf32, #tpu.memory_space<vmem>>) attributes {dimension_semantics = [#tpu.dimension_semantics<parallel>, #tpu.dimension_semantics<arbitrary>], iteration_bounds = array<i64: 1, 1>, scalar_prefetch = 0 : i64, scratch_operands = 2 : i64, tpu.core_type = #tpu.core_type<tc>, window_params = [{transform_indices = @transform_0, window_bounds = array<i64: 16, 128>}, {transform_indices = @transform_1, window_bounds = array<i64: 16, 128>}, {transform_indices = @transform_2, window_bounds = array<i64: 1, 2>}]} {
    %c0_i32 = arith.constant 0 : i32
    %0 = arith.cmpi eq, %arg1, %c0_i32 : i32
    %1 = arith.extui %0 : i1 to i32
    %c0_i32_0 = arith.constant 0 : i32
    %2 = arith.cmpi ne, %1, %c0_i32_0 : i32
    scf.if %2 {
      %cst_18 = arith.constant 0.000000e+00 : f32
      %27 = vector.broadcast %cst_18 : f32 to vector<8x128xf32>
      %c0_19 = arith.constant 0 : index
      %c0_20 = arith.constant 0 : index
      %28 = vector.load %arg5[%c0_19, %c0_20] : memref<8x128xf32, #tpu.memory_space<vmem>>, vector<8x128xf32>
      tpu.vector_store %arg5[%c0_19, %c0_20], %27 {strides = array<i32>} : memref<8x128xf32, #tpu.memory_space<vmem>>, vector<8x128xf32>,
      %cst_21 = arith.constant 0.000000e+00 : f32
      %29 = vector.broadcast %cst_21 : f32 to vector<8x128xf32>
      %c0_22 = arith.constant 0 : index
      %c0_23 = arith.constant 0 : index
      %30 = vector.load %arg6[%c0_22, %c0_23] : memref<8x128xf32, #tpu.memory_space<vmem>>, vector<8x128xf32>
      tpu.vector_store %arg6[%c0_22, %c0_23], %29 {strides = array<i32>} : memref<8x128xf32, #tpu.memory_space<vmem>>, vector<8x128xf32>,
    } else {
    }
    %c0 = arith.constant 0 : index
    %c0_1 = arith.constant 0 : index
    %3 = vector.load %arg2[%c0, %c0_1] : memref<16x128xf32, #tpu.memory_space<vmem>>, vector<16x128xf32>
    %c0_2 = arith.constant 0 : index
    %c0_3 = arith.constant 0 : index
    %4 = vector.load %arg3[%c0_2, %c0_3] : memref<16x128xf32, #tpu.memory_space<vmem>>, vector<16x128xf32>
    %cst = arith.constant 5.000000e-01 : f32
    %5 = vector.broadcast %cst : f32 to vector<16x128xf32>
    %6 = arith.mulf %5, %3 : vector<16x128xf32>
    %7 = math.tanh %6 : vector<16x128xf32>
    %cst_4 = arith.constant 5.000000e-01 : f32
    %8 = vector.broadcast %cst_4 : f32 to vector<16x128xf32>
    %9 = arith.mulf %8, %7 : vector<16x128xf32>
    %cst_5 = arith.constant 5.000000e-01 : f32
    %10 = vector.broadcast %cst_5 : f32 to vector<16x128xf32>
    %11 = arith.addf %9, %10 : vector<16x128xf32>
    %12 = arith.addf %11, %4 : vector<16x128xf32>
    %13 = arith.mulf %11, %4 : vector<16x128xf32>
    %c0_6 = arith.constant 0 : index
    %c0_7 = arith.constant 0 : index
    %14 = vector.load %arg5[%c0_6, %c0_7] : memref<8x128xf32, #tpu.memory_space<vmem>>, vector<8x128xf32>
    %15 = vector.shape_cast %12 : vector<16x128xf32> to vector<2x8x128xf32>
    %cst_8 = arith.constant dense<0.000000e+00> : vector<8x128xf32>
    %16 = vector.multi_reduction <add>, %15, %cst_8 [0] : vector<2x8x128xf32> to vector<8x128xf32>
    %17 = arith.addf %14, %16 : vector<8x128xf32>
    %c0_9 = arith.constant 0 : index
    %c0_10 = arith.constant 0 : index
    %18 = vector.load %arg5[%c0_9, %c0_10] : memref<8x128xf32, #tpu.memory_space<vmem>>, vector<8x128xf32>
    tpu.vector_store %arg5[%c0_9, %c0_10], %17 {strides = array<i32>} : memref<8x128xf32, #tpu.memory_space<vmem>>, vector<8x128xf32>,
    %c0_11 = arith.constant 0 : index
    %c0_12 = arith.constant 0 : index
    %19 = vector.load %arg6[%c0_11, %c0_12] : memref<8x128xf32, #tpu.memory_space<vmem>>, vector<8x128xf32>
    %20 = vector.shape_cast %13 : vector<16x128xf32> to vector<2x8x128xf32>
    %cst_13 = arith.constant dense<0.000000e+00> : vector<8x128xf32>
    %21 = vector.multi_reduction <add>, %20, %cst_13 [0] : vector<2x8x128xf32> to vector<8x128xf32>
    %22 = arith.addf %19, %21 : vector<8x128xf32>
    %c0_14 = arith.constant 0 : index
    %c0_15 = arith.constant 0 : index
    %23 = vector.load %arg6[%c0_14, %c0_15] : memref<8x128xf32, #tpu.memory_space<vmem>>, vector<8x128xf32>
    tpu.vector_store %arg6[%c0_14, %c0_15], %22 {strides = array<i32>} : memref<8x128xf32, #tpu.memory_space<vmem>>, vector<8x128xf32>,
    %c0_i32_16 = arith.constant 0 : i32
    %24 = arith.cmpi eq, %arg1, %c0_i32_16 : i32
    %25 = arith.extui %24 : i1 to i32
    %c0_i32_17 = arith.constant 0 : i32
    %26 = arith.cmpi ne, %25, %c0_i32_17 : i32
    scf.if %26 {
      %c0_18 = arith.constant 0 : index
      %c0_19 = arith.constant 0 : index
      %27 = vector.load %arg5[%c0_18, %c0_19] : memref<8x128xf32, #tpu.memory_space<vmem>>, vector<8x128xf32>
      %28 = vector.shape_cast %27 : vector<8x128xf32> to vector<1x8x128xf32>
      %cst_20 = arith.constant dense<0.000000e+00> : vector<1xf32>
      %29 = vector.multi_reduction <add>, %28, %cst_20 [1, 2] : vector<1x8x128xf32> to vector<1xf32>
      %30 = vector.shape_cast %29 : vector<1xf32> to vector<1x1x1xf32>
      %31 = vector.extract %30[0, 0, 0] : f32 from vector<1x1x1xf32>
      %c0_21 = arith.constant 0 : index
      %c0_22 = arith.constant 0 : index
      %32 = memref.load %arg4[%c0_21, %c0_22] : memref<1x2xf32, #tpu.memory_space<smem>>
      memref.store %31, %arg4[%c0_21, %c0_22] : memref<1x2xf32, #tpu.memory_space<smem>>
      %c0_23 = arith.constant 0 : index
      %c0_24 = arith.constant 0 : index
      %33 = vector.load %arg6[%c0_23, %c0_24] : memref<8x128xf32, #tpu.memory_space<vmem>>, vector<8x128xf32>
      %34 = vector.shape_cast %33 : vector<8x128xf32> to vector<1x8x128xf32>
      %cst_25 = arith.constant dense<0.000000e+00> : vector<1xf32>
      %35 = vector.multi_reduction <add>, %34, %cst_25 [1, 2] : vector<1x8x128xf32> to vector<1xf32>
      %36 = vector.shape_cast %35 : vector<1xf32> to vector<1x1x1xf32>
      %37 = vector.extract %36[0, 0, 0] : f32 from vector<1x1x1xf32>
      %c0_26 = arith.constant 0 : index
      %c1 = arith.constant 1 : index
      %38 = memref.load %arg4[%c0_26, %c1] : memref<1x2xf32, #tpu.memory_space<smem>>
      memref.store %37, %arg4[%c0_26, %c1] : memref<1x2xf32, #tpu.memory_space<smem>>
    } else {
    }
    return
  }
  func.func @transform_0(%arg0: i32, %arg1: i32) -> (i32, i32) {
    %c1_i32 = arith.constant 1 : i32
    %0 = arith.muli %arg0, %c1_i32 : i32
    %1 = arith.addi %0, %arg1 : i32
    %c0_i32 = arith.constant 0 : i32
    %2 = arith.minsi %1, %c0_i32 : i32
    %c0_i32_0 = arith.constant 0 : i32
    %c0_i32_1 = arith.constant 0 : i32
    return %2, %c0_i32_0 : i32, i32
  }
  func.func @transform_1(%arg0: i32, %arg1: i32) -> (i32, i32) {
    %c1_i32 = arith.constant 1 : i32
    %0 = arith.muli %arg0, %c1_i32 : i32
    %1 = arith.addi %0, %arg1 : i32
    %c0_i32 = arith.constant 0 : i32
    %2 = arith.minsi %1, %c0_i32 : i32
    %c0_i32_0 = arith.constant 0 : i32
    %c0_i32_1 = arith.constant 0 : i32
    return %2, %c0_i32_0 : i32, i32
  }
  func.func @transform_2(%arg0: i32, %arg1: i32) -> (i32, i32) {
    %c0_i32 = arith.constant 0 : i32
    %c0_i32_0 = arith.constant 0 : i32
    return %arg0, %c0_i32 : i32, i32
  }
}

</mosaic_0001>

<llo_original>
// kernel: tpu_custom_call.1
$region0: #{tpu_custom_call.1}
  #allocation0 [shape = 'u32[]', space=smem, size = 0x4, offset = 0x4, fixed_abs, tag = 'smem constant byte address 0x4 - core index']
  #allocation1 [shape = 'u32[144,128]{1,0:T(1,128)}', space=vmem, size = 0x12000, scoped, tag = 'internal scratch']
  #allocation2 [shape = 'f32[8,128]{1,0:T(8,128)}', space=vmem, size = 0x1000, scoped, tag = 'scratch operand']
  #allocation3 [shape = 'f32[8,128]{1,0:T(8,128)}', space=vmem, size = 0x1000, scoped, tag = 'scratch operand']
  %s0 = inlined_call_operand.hbm [shape: f32[16,128], index: 0, kind: input, shape index: {}]
  %s1 = inlined_call_operand.hbm [shape: f32[16,128], index: 1, kind: input, shape index: {}]
  %s2 = inlined_call_operand.hbm [shape: f32[1,2], index: 2, kind: output, shape index: {}]
  %s3 = sld [smem:[#allocation0]]
  $region34: #{tpu_custom_call.1} parent=0
    _
  %s5 = ssub.s32 1, %s3
  %s6 = scalar_select 0, %s5, %s3
  $region1: #{tpu_custom_call.1} parent=0
    #allocation4 [shape = 'u8[8192]{0}', space=vmem, size = 0x2000, scoped, tag = 'input window, operand 0, single buffered']
    #allocation5 [shape = 's32[1]{0}', space=sflag, size = 0x4, scoped, tag = 'scoped memory for tpu_custom_call.1']
    #allocation6 [shape = 's32[1]{0}', space=sflag, size = 0x4, scoped, tag = 'scoped memory for tpu_custom_call.1']
    #allocation7 [shape = 'u8[8192]{0}', space=vmem, size = 0x2000, scoped, tag = 'input window, operand 1, single buffered']
    #allocation8 [shape = 's32[1]{0}', space=sflag, size = 0x4, scoped, tag = 'scoped memory for tpu_custom_call.1']
    #allocation9 [shape = 'u8[512]{0}', space=smem, size = 0x200, scoped, tag = 'output window, operand 0, single buffered']
    %7 = vsyncpa [#allocation5], 0
    %8 = vsyncpa [#allocation8], 0
    %9 = vsyncpa [#allocation6], 0
    // Predicated region
    $region2: #{tpu_custom_call.1} parent=1 // pred_check
      _
    $region3: #{tpu_custom_call.1} parent=1 // pred_check_branch
      %11 = sbr.rel (0) target = $region5
    $region4: #{tpu_custom_call.1} parent=1 // pred_region
      %s12 = sadd.s32 0, 0
      %p13 = scmp.lt.s32.totalorder %s12, 0
      %s14 = scalar_select %p13, %s12, 0
      %s15 = smul.u32 2, %s14
      %s17 = ssub.s32 256, 256
      %18 = vsyncadd [#allocation5], %s17
      %s19 = smul.addr %s15, 128
      %s20 = scalar_lea.hbm %s0, %s19
      %s21 = sshll.u32 [#allocation4], 4
      %s22 = int_to_ptr.vmem [resolvable:$true] %s21
      %27 = dma.hbm_to_vmem [thread:$0]  %s20, 256, %s22, [#allocation5], 128, 128, 8
    $region5: #{tpu_custom_call.1} parent=1 // pred_fallthru
      _
    // Predicated region
    $region6: #{tpu_custom_call.1} parent=1 // pred_check
      _
    $region7: #{tpu_custom_call.1} parent=1 // pred_check_branch
      %29 = sbr.rel (0) target = $region9
    $region8: #{tpu_custom_call.1} parent=1 // pred_region
      %s30 = sadd.s32 0, 0
      %p31 = scmp.lt.s32.totalorder %s30, 0
      %s32 = scalar_select %p31, %s30, 0
      %s33 = smul.u32 2, %s32
      %s35 = ssub.s32 256, 256
      %36 = vsyncadd [#allocation8], %s35
      %s37 = smul.addr %s33, 128
      %s38 = scalar_lea.hbm %s1, %s37
      %s39 = sshll.u32 [#allocation7], 4
      %s40 = int_to_ptr.vmem [resolvable:$true] %s39
      %45 = dma.hbm_to_vmem [thread:$0]  %s38, 256, %s40, [#allocation8], 128, 128, 8
    $region9: #{tpu_custom_call.1} parent=1 // pred_fallthru
      _
    // Predicated region
    $region10: #{tpu_custom_call.1} parent=1 // pred_check
      _
    $region11: #{tpu_custom_call.1} parent=1 // pred_check_branch
      %47 = sbr.rel (0) target = $region13
    $region12: #{tpu_custom_call.1} parent=1 // pred_region
      %48 = dma.done [#allocation5], 256
    $region13: #{tpu_custom_call.1} parent=1 // pred_fallthru
      _
    // Predicated region
    $region14: #{tpu_custom_call.1} parent=1 // pred_check
      _
    $region15: #{tpu_custom_call.1} parent=1 // pred_check_branch
      %50 = sbr.rel (0) target = $region17
    $region16: #{tpu_custom_call.1} parent=1 // pred_region
      %51 = dma.done [#allocation8], 256
    $region17: #{tpu_custom_call.1} parent=1 // pred_fallthru
      _
    %s52 = sadd.s32 0, 0
    %p53 = scmp.lt.s32.totalorder %s52, 0
    %s54 = scalar_select %p53, %s52, 0
    %s55 = smul.u32 2, %s54
    %s56 = sadd.s32 0, 0
    %p57 = scmp.lt.s32.totalorder %s56, 0
    %s58 = scalar_select %p57, %s56, 0
    %s59 = smul.u32 2, %s58
    %p60 = scmp.eq.s32.totalorder 0, 0
    // Predicated region
    $region18: #{tpu_custom_call.1} parent=1 // pred_check
      %p61 = pneg %p60
    $region19: #{tpu_custom_call.1} parent=1 // pred_check_branch
      %63 = sbr.rel (%p61) target = $region21
    $region20: #{tpu_custom_call.1} parent=1 // pred_region
      %64 = vst [vmem:[#allocation2] sm:$0xff] 0.0
      %65 = vst [vmem:[#allocation3] sm:$0xff] 0.0
    $region21: #{tpu_custom_call.1} parent=1 // pred_fallthru
      _
    %v66 = vld [vmem:[#allocation4] sm:$0xff]
    %v67 = vld [vmem:[#allocation4 + $0x8] sm:$0xff]
    %v68 = vld [vmem:[#allocation7] sm:$0xff]
    %v69 = vld [vmem:[#allocation7 + $0x8] sm:$0xff]
    %v70 = vmul.f32 %v66, 0.5
    %v71 = vmul.f32 %v67, 0.5
    %v72 = vtanh.pop %v70
    %v73 = vtanh.pop %v71
    %v74 = vmul.f32 %v72, 0.5
    %v75 = vmul.f32 %v73, 0.5
    %v76 = vadd.f32 %v74, 0.5
    %v77 = vadd.f32 %v75, 0.5
    %v78 = vadd.f32 %v76, %v68
    %v79 = vadd.f32 %v77, %v69
    %v80 = vmul.f32 %v76, %v68
    %v81 = vmul.f32 %v77, %v69
    %v82 = vld [vmem:[#allocation2] sm:$0xff]
    %v83 = vadd.f32 %v78, %v79
    %v84 = vadd.f32 %v82, %v83
    %85 = vst [vmem:[#allocation2] sm:$0xff] %v84
    %v86 = vld [vmem:[#allocation3] sm:$0xff]
    %v87 = vadd.f32 %v80, %v81
    %v88 = vadd.f32 %v86, %v87
    %89 = vst [vmem:[#allocation3] sm:$0xff] %v88
    // Predicated region
    $region22: #{tpu_custom_call.1} parent=1 // pred_check
      %p90 = pneg %p60
    $region23: #{tpu_custom_call.1} parent=1 // pred_check_branch
      %92 = sbr.rel (%p90) target = $region25
    $region24: #{tpu_custom_call.1} parent=1 // pred_region
      %v93 = vld [vmem:[#allocation2] sm:$0xff]
      %94 = vadd.xlane.f32.xlu0 %v93
      %v95 = vpop.xlane.xlu0 %94
      %v96 = vrot.slane %v95, 4
      %v97 = vadd.f32 %v95, %v96
      %v98 = vrot.slane %v97, 2
      %v99 = vadd.f32 %v97, %v98
      %v100 = vrot.slane %v99, 1
      %v101 = vadd.f32 %v99, %v100
      %s102 = vtos %v101
      %s103 = scalar_lea.smem [#allocation9], 0
      %104 = sst [smem:[%s103]] %s102
      %v105 = vld [vmem:[#allocation3] sm:$0xff]
      %106 = vadd.xlane.f32.xlu0 %v105
      %v107 = vpop.xlane.xlu0 %106
      %v108 = vrot.slane %v107, 4
      %v109 = vadd.f32 %v107, %v108
      %v110 = vrot.slane %v109, 2
      %v111 = vadd.f32 %v109, %v110
      %v112 = vrot.slane %v111, 1
      %v113 = vadd.f32 %v111, %v112
      %s114 = vtos %v113
      %s115 = scalar_lea.smem [#allocation9], 1
      %116 = sst [smem:[%s115]] %s114
    $region25: #{tpu_custom_call.1} parent=1 // pred_fallthru
      _
    // Predicated region
    $region26: #{tpu_custom_call.1} parent=1 // pred_check
      _
    $region27: #{tpu_custom_call.1} parent=1 // pred_check_branch
      %118 = sbr.rel (0) target = $region29
    $region28: #{tpu_custom_call.1} parent=1 // pred_region
      %s120 = ssub.s32 16, 16
      %121 = vsyncadd [#allocation6], %s120
      %124 = dma.smem_to_hbm [#allocation9], 16, %s2, [#allocation6]
    $region29: #{tpu_custom_call.1} parent=1 // pred_fallthru
      _
    // Predicated region
    $region30: #{tpu_custom_call.1} parent=1 // pred_check
      _
    $region31: #{tpu_custom_call.1} parent=1 // pred_check_branch
      %126 = sbr.rel (0) target = $region33
    $region32: #{tpu_custom_call.1} parent=1 // pred_region
      %127 = dma.done [#allocation6], 16
    $region33: #{tpu_custom_call.1} parent=1 // pred_fallthru
      _
    %128 = sfence
    %129 = vsyncpa [#allocation5], 1
    %130 = vsyncpa [#allocation8], 1
    %131 = vsyncpa [#allocation6], 1

</llo_original>
